<compile_context>
chip_gen: v7x
topology: tpu7x:2x2x1
jax: 0.10.0
libtpu: 0.0.40
codegen_flags: <defaults>
</compile_context>

<pallas_src>
import functools

import jax
import jax.numpy as jnp
from jax.experimental import pallas as pl
from jax.experimental.pallas import tpu as pltpu


# ----------------------------------------------------------------------------
# Fused per-step kernel
#   x_ref   : (V, Cin, S)  images, NCHW spatially flattened (S = H*W on lanes)
#   w_ref   : (Cin, J, 1)  1x1-conv weights * heatmap_multiplier   (resident)
#   b_ref   : (1, J, 1)    1x1-conv bias (confidence head only)    (resident)
#   col_ref : (1, 1, S)    x pixel coordinate per flat spatial idx (resident)
#   row_ref : (1, 1, S)    y pixel coordinate                      (resident)
#   o_ref   : (V, J, 3)    lanes = [x, y, confidence]
# ----------------------------------------------------------------------------
def _fused_pretri_kernel(x_ref, w_ref, b_ref, col_ref, row_ref, o_ref, *,
                         inv_s_mult):
    V, Cin, S = x_ref.shape
    J = w_ref.shape[1]

    xv = x_ref[...]                                   # (V, Cin, S)
    wv = w_ref[...]                                   # (Cin, J, 1)

    # 1x1-conv heatmap head as Cin broadcast FMAs on the VPU (the MXU would be
    # <1% utilized with K=Cin=3).  hm is the *scaled* heatmap, (V, J, S), and
    # never leaves VMEM/vregs.
    hm = wv[0:1] * xv[:, 0:1, :]
    for c in range(1, Cin):
        hm = hm + wv[c:c + 1] * xv[:, c:c + 1, :]

    # Synthetic confidence head: sigmoid(spatial mean of the un-scaled conv + b).
    conf = jax.nn.sigmoid(
        jnp.sum(hm, axis=-1, keepdims=True) * inv_s_mult + b_ref[...])   # (V, J, 1)

    # integrate_tensor_2d: softmax over the spatial (lane) axis + soft-argmax
    # expectation over the resident pixel-coordinate planes.  Un-normalized:
    # one exact reciprocal per (view, joint) instead of a full (V, J, S) divide.
    m = jnp.max(hm, axis=-1, keepdims=True)                   # (V, J, 1)  XLU
    e = jnp.exp(hm - m)                                       # (V, J, S)  EUP
    s = jnp.sum(e, axis=-1, keepdims=True)                    # (V, J, 1)
    sx = jnp.sum(e * col_ref[...], axis=-1, keepdims=True)    # (V, J, 1)
    sy = jnp.sum(e * row_ref[...], axis=-1, keepdims=True)    # (V, J, 1)
    inv = pl.reciprocal(s, approx=False)                      # exact, per review
    xj = sx * inv
    yj = sy * inv

    # Pack [x, y, conf] into the (V, J, 3) output block and issue ONE store.
    lane = jax.lax.broadcasted_iota(jnp.int32, (V, J, 3), 2)
    o_ref[...] = jnp.where(lane == 0, xj, jnp.where(lane == 1, yj, conf))


# ----------------------------------------------------------------------------
# Tiling helpers
# ----------------------------------------------------------------------------
def _step_vmem_bytes(V, Cin, S, J):
    """Rough per-step VMEM footprint (f32, lane/sublane padded)."""
    f = 4
    jpad = -(-J // 8) * 8
    cpad = -(-Cin // 8) * 8
    spad = -(-S // 128) * 128
    x_tile = 2 * V * cpad * spad * f           # double-buffered input block
    out_tile = 2 * V * jpad * 128 * f          # double-buffered output block
    resident = (Cin * jpad * 128 + jpad * 128 + 2 * 8 * spad) * f  # w, b, col, row
    inter = 3 * V * jpad * spad * f            # hm / e / e*coord live values
    return x_tile + out_tile + resident + inter


def _pick_views_per_step(N, Cin, S, J, budget_bytes):
    fits = [v for v in range(1, N + 1)
            if N % v == 0 and _step_vmem_bytes(v, Cin, S, J) <= budget_bytes]
    return max(fits) if fits else 1


def _is_v7x():
    try:
        return "v7" in jax.devices()[0].device_kind.lower()
    except Exception:
        return False


# ----------------------------------------------------------------------------
# Wrapper
# ----------------------------------------------------------------------------
def alg_pose3d_pre_triangulation(images, prjMats, w, b, *,
                                 heatmap_multiplier=100.0):
    """images: (N, H, W, Cin) NHWC; prjMats: (N, 3, 4).  Returns (A, confidence)."""
    N, H, W, Cin = images.shape
    J = w.shape[1]
    S = H * W

    # Views per grid step: largest divisor of N whose lane-dense tiles fit a
    # 48 MiB budget (headroom inside v7x's 64 MiB physical VMEM).  On single-TC
    # v5e/v6e grid=(1,) is optimal when everything fits; on v7x keep the grid
    # length even so megacore shards it across both TensorCores.
    budget = 48 * 1024 * 1024
    V = _pick_views_per_step(N, Cin, S, J, budget)
    if _is_v7x() and N % 2 == 0 and (N // V) % 2 == 1:
        even = [v for v in range(1, V + 1) if N % v == 0 and (N // v) % 2 == 0]
        if even:
            V = max(even)
    grid = (N // V,)

    # Operand prep (layout plumbing, all tiny except the NHWC->NCHW transpose,
    # which the module itself performs before the backbone; with a real NCHW
    # backbone output this transpose disappears).
    x = jnp.transpose(images.astype(jnp.float32), (0, 3, 1, 2)).reshape(N, Cin, S)
    # heatmap_multiplier folded into the conv weights (exp path); raw bias only
    # feeds the confidence sigmoid.
    w_s = (w.astype(jnp.float32) * float(heatmap_multiplier)).reshape(Cin, J, 1)
    b_c = b.astype(jnp.float32).reshape(1, J, 1)
    idx = jnp.arange(S, dtype=jnp.int32)
    col = (idx % W).astype(jnp.float32).reshape(1, 1, S)
    row = (idx // W).astype(jnp.float32).reshape(1, 1, S)

    kfn = functools.partial(
        _fused_pretri_kernel,
        inv_s_mult=1.0 / (float(S) * float(heatmap_multiplier)))

    flops = N * S * J * (2 * Cin + 8)
    transcendentals = N * S * J + 4 * N * J
    bytes_accessed = 4 * (N * Cin * S + Cin * J + J + 2 * S + N * J * 3)
    vmem_limit = int(min(64 * 1024 * 1024,
                         max(16 * 1024 * 1024,
                             2 * _step_vmem_bytes(V, Cin, S, J))))

    out = pl.pallas_call(
        kfn,
        out_shape=jax.ShapeDtypeStruct((N, J, 3), jnp.float32),
        grid=grid,
        in_specs=[
            pl.BlockSpec((V, Cin, S), lambda i: (i, 0, 0)),   # x: streamed
            pl.BlockSpec((Cin, J, 1), lambda i: (0, 0, 0)),   # w: VMEM-resident
            pl.BlockSpec((1, J, 1), lambda i: (0, 0, 0)),     # b: resident
            pl.BlockSpec((1, 1, S), lambda i: (0, 0, 0)),     # col plane: resident
            pl.BlockSpec((1, 1, S), lambda i: (0, 0, 0)),     # row plane: resident
        ],
        out_specs=pl.BlockSpec((V, J, 3), lambda i: (i, 0, 0)),
        compiler_params=pltpu.CompilerParams(
            dimension_semantics=("parallel",),
            vmem_limit_bytes=vmem_limit,
        ),
        cost_estimate=pl.CostEstimate(
            flops=flops,
            transcendentals=transcendentals,
            bytes_accessed=bytes_accessed,
        ),
    )(x, w_s, b_c, col, row)

    # Tiny (N*J*2*4-element) DLT-row assembly; one wrapper-side fused XLA
    # elementwise op (replaces the old unpack/transpose); projection matrices
    # never enter the kernel.
    joints2d = out[:, :, 0:2]                                  # (N, J, 2)
    confidence = out[:, :, 2]                                  # (N, J)
    prj = prjMats.astype(jnp.float32)
    P1 = prj[:, 2, :]                                          # (N, 4)  = P[2, :]
    P2 = prj[:, :2, :]                                         # (N, 2, 4)
    A = confidence[:, :, None, None] * (
        joints2d[:, :, :, None] * P1[:, None, None, :] - P2[:, None, :, :])
    return A, confidence


# ----------------------------------------------------------------------------
# Pure-JAX reference for validation.
# ----------------------------------------------------------------------------
def _reference(images, prjMats, w, b, multiplier):
    N, H, W, Cin = images.shape
    J = w.shape[1]
    hm = jnp.einsum("nhwc,cj->nhwj", images, w) + b            # (N, H, W, J)
    hm = jnp.transpose(hm, (0, 3, 1, 2))                       # NCHW
    conf = jax.nn.sigmoid(jnp.mean(hm.reshape(N, J, -1), axis=-1))   # (N, J)
    p = jax.nn.softmax((hm * multiplier).reshape(N, J, -1), axis=-1).reshape(
        N, J, H, W)
    xs = jnp.arange(W, dtype=jnp.float32)
    ys = jnp.arange(H, dtype=jnp.float32)
    x = jnp.sum(p.sum(axis=2) * xs, axis=-1)                   # (N, J)
    y = jnp.sum(p.sum(axis=3) * ys, axis=-1)                   # (N, J)
    j2d = jnp.stack([x, y], axis=-1)                           # (N, J, 2)
    P1 = prjMats[:, 2:3, :]                                    # (N, 1, 4)
    P2 = prjMats[:, :2, :]                                     # (N, 2, 4)
    A = conf[:, :, None, None] * (
        j2d[..., None] * P1[:, None, :, :] - P2[:, None, :, :])
    return A, conf


if __name__ == "__main__":
    key = jax.random.PRNGKey(0)
    k1, k2, k3, k4 = jax.random.split(key, 4)

    N, H, W, Cin, J = 4, 16, 16, 3, 17
    images = jax.random.normal(k1, (N, H, W, Cin), dtype=jnp.float32)
    prjMats = jax.random.normal(k2, (N, 3, 4), dtype=jnp.float32)
    w = jax.random.normal(k3, (Cin, J), dtype=jnp.float32) * 0.1
    b = jax.random.normal(k4, (J,), dtype=jnp.float32) * 0.01

    fwd = jax.jit(functools.partial(alg_pose3d_pre_triangulation,
                                    heatmap_multiplier=100.0))
    A, conf = fwd(images, prjMats, w, b)
    jax.block_until_ready((A, conf))

    A_ref, conf_ref = _reference(images, prjMats, w, b, 100.0)
    assert A.shape == (N, J, 2, 4), A.shape
    assert conf.shape == (N, J), conf.shape
    assert jnp.allclose(conf, conf_ref, atol=1e-4, rtol=1e-4)
    assert jnp.allclose(A, A_ref, atol=5e-3, rtol=5e-3)

    print("KERNEL_OK")
</pallas_src>

<mosaic_0001>
module attributes {stable_mosaic.version = 11 : i64} {
  func.func @_fused_pretri_kernel(%arg0: i32, %arg1: memref<4x3x256xf32, #tpu.memory_space<vmem>>, %arg2: memref<3x17x1xf32, #tpu.memory_space<vmem>>, %arg3: memref<1x17x1xf32, #tpu.memory_space<vmem>>, %arg4: memref<1x1x256xf32, #tpu.memory_space<vmem>>, %arg5: memref<1x1x256xf32, #tpu.memory_space<vmem>>, %arg6: memref<4x17x3xf32, #tpu.memory_space<vmem>>) attributes {dimension_semantics = [#tpu.dimension_semantics<parallel>], iteration_bounds = array<i64: 1>, scalar_prefetch = 0 : i64, scratch_operands = 0 : i64, tpu.core_type = #tpu.core_type<tc>, window_params = [{transform_indices = @transform_0, window_bounds = array<i64: 4, 3, 256>}, {pipeline_mode = #tpu.pipeline_mode<synchronous>, transform_indices = @transform_1, window_bounds = array<i64: 3, 17, 1>}, {pipeline_mode = #tpu.pipeline_mode<synchronous>, transform_indices = @transform_2, window_bounds = array<i64: 1, 17, 1>}, {pipeline_mode = #tpu.pipeline_mode<synchronous>, transform_indices = @transform_3, window_bounds = array<i64: 1, 1, 256>}, {pipeline_mode = #tpu.pipeline_mode<synchronous>, transform_indices = @transform_4, window_bounds = array<i64: 1, 1, 256>}, {transform_indices = @transform_5, window_bounds = array<i64: 4, 17, 3>}]} {
    %c0 = arith.constant 0 : index
    %c0_0 = arith.constant 0 : index
    %c0_1 = arith.constant 0 : index
    %0 = vector.load %arg1[%c0, %c0_0, %c0_1] : memref<4x3x256xf32, #tpu.memory_space<vmem>>, vector<4x3x256xf32>
    %c0_2 = arith.constant 0 : index
    %c0_3 = arith.constant 0 : index
    %c0_4 = arith.constant 0 : index
    %1 = vector.load %arg2[%c0_2, %c0_3, %c0_4] : memref<3x17x1xf32, #tpu.memory_space<vmem>>, vector<3x17x1xf32>
    %2 = vector.extract_strided_slice %1 {offsets = [0, 0, 0], sizes = [1, 17, 1], strides = [1, 1, 1]} : vector<3x17x1xf32> to vector<1x17x1xf32>
    %3 = vector.extract_strided_slice %0 {offsets = [0, 0, 0], sizes = [4, 1, 256], strides = [1, 1, 1]} : vector<4x3x256xf32> to vector<4x1x256xf32>
    %4 = vector.broadcast %2 : vector<1x17x1xf32> to vector<4x17x256xf32>
    %5 = vector.broadcast %3 : vector<4x1x256xf32> to vector<4x17x256xf32>
    %6 = arith.mulf %4, %5 : vector<4x17x256xf32>
    %7 = vector.extract_strided_slice %1 {offsets = [1, 0, 0], sizes = [1, 17, 1], strides = [1, 1, 1]} : vector<3x17x1xf32> to vector<1x17x1xf32>
    %8 = vector.extract_strided_slice %0 {offsets = [0, 1, 0], sizes = [4, 1, 256], strides = [1, 1, 1]} : vector<4x3x256xf32> to vector<4x1x256xf32>
    %9 = vector.broadcast %7 : vector<1x17x1xf32> to vector<4x17x256xf32>
    %10 = vector.broadcast %8 : vector<4x1x256xf32> to vector<4x17x256xf32>
    %11 = arith.mulf %9, %10 : vector<4x17x256xf32>
    %12 = arith.addf %6, %11 : vector<4x17x256xf32>
    %13 = vector.extract_strided_slice %1 {offsets = [2, 0, 0], sizes = [1, 17, 1], strides = [1, 1, 1]} : vector<3x17x1xf32> to vector<1x17x1xf32>
    %14 = vector.extract_strided_slice %0 {offsets = [0, 2, 0], sizes = [4, 1, 256], strides = [1, 1, 1]} : vector<4x3x256xf32> to vector<4x1x256xf32>
    %15 = vector.broadcast %13 : vector<1x17x1xf32> to vector<4x17x256xf32>
    %16 = vector.broadcast %14 : vector<4x1x256xf32> to vector<4x17x256xf32>
    %17 = arith.mulf %15, %16 : vector<4x17x256xf32>
    %18 = arith.addf %12, %17 : vector<4x17x256xf32>
    %cst = arith.constant dense<0.000000e+00> : vector<4x17xf32>
    %19 = vector.multi_reduction <add>, %18, %cst [2] : vector<4x17x256xf32> to vector<4x17xf32>
    %20 = vector.shape_cast %19 : vector<4x17xf32> to vector<4x17x1xf32>
    %cst_5 = arith.constant 3.906250e-05 : f32
    %21 = vector.broadcast %cst_5 : f32 to vector<4x17x1xf32>
    %22 = arith.mulf %20, %21 : vector<4x17x1xf32>
    %c0_6 = arith.constant 0 : index
    %c0_7 = arith.constant 0 : index
    %c0_8 = arith.constant 0 : index
    %23 = vector.load %arg3[%c0_6, %c0_7, %c0_8] : memref<1x17x1xf32, #tpu.memory_space<vmem>>, vector<1x17x1xf32>
    %24 = vector.broadcast %23 : vector<1x17x1xf32> to vector<4x17x1xf32>
    %25 = arith.addf %22, %24 : vector<4x17x1xf32>
    %26 = arith.negf %25 : vector<4x17x1xf32>
    %27 = math.exp %26 : vector<4x17x1xf32>
    %cst_9 = arith.constant 1.000000e+00 : f32
    %28 = vector.broadcast %cst_9 : f32 to vector<4x17x1xf32>
    %29 = arith.addf %28, %27 : vector<4x17x1xf32>
    %30 = arith.divf %28, %29 : vector<4x17x1xf32>
    %cst_10 = arith.constant dense<0xFF800000> : vector<4x17xf32>
    %31 = vector.multi_reduction <maximumf>, %18, %cst_10 [2] : vector<4x17x256xf32> to vector<4x17xf32>
    %32 = vector.shape_cast %31 : vector<4x17xf32> to vector<4x17x1xf32>
    %33 = vector.broadcast %32 : vector<4x17x1xf32> to vector<4x17x256xf32>
    %34 = arith.subf %18, %33 : vector<4x17x256xf32>
    %35 = math.exp %34 : vector<4x17x256xf32>
    %cst_11 = arith.constant dense<0.000000e+00> : vector<4x17xf32>
    %36 = vector.multi_reduction <add>, %35, %cst_11 [2] : vector<4x17x256xf32> to vector<4x17xf32>
    %37 = vector.shape_cast %36 : vector<4x17xf32> to vector<4x17x1xf32>
    %c0_12 = arith.constant 0 : index
    %c0_13 = arith.constant 0 : index
    %c0_14 = arith.constant 0 : index
    %38 = vector.load %arg4[%c0_12, %c0_13, %c0_14] : memref<1x1x256xf32, #tpu.memory_space<vmem>>, vector<1x1x256xf32>
    %39 = vector.broadcast %38 : vector<1x1x256xf32> to vector<4x17x256xf32>
    %40 = arith.mulf %35, %39 : vector<4x17x256xf32>
    %cst_15 = arith.constant dense<0.000000e+00> : vector<4x17xf32>
    %41 = vector.multi_reduction <add>, %40, %cst_15 [2] : vector<4x17x256xf32> to vector<4x17xf32>
    %42 = vector.shape_cast %41 : vector<4x17xf32> to vector<4x17x1xf32>
    %c0_16 = arith.constant 0 : index
    %c0_17 = arith.constant 0 : index
    %c0_18 = arith.constant 0 : index
    %43 = vector.load %arg5[%c0_16, %c0_17, %c0_18] : memref<1x1x256xf32, #tpu.memory_space<vmem>>, vector<1x1x256xf32>
    %44 = vector.broadcast %43 : vector<1x1x256xf32> to vector<4x17x256xf32>
    %45 = arith.mulf %35, %44 : vector<4x17x256xf32>
    %cst_19 = arith.constant dense<0.000000e+00> : vector<4x17xf32>
    %46 = vector.multi_reduction <add>, %45, %cst_19 [2] : vector<4x17x256xf32> to vector<4x17xf32>
    %47 = vector.shape_cast %46 : vector<4x17xf32> to vector<4x17x1xf32>
    %48 = tpu.reciprocal %37 : vector<4x17x1xf32> -> vector<4x17x1xf32>
    %49 = arith.mulf %42, %48 : vector<4x17x1xf32>
    %50 = arith.mulf %47, %48 : vector<4x17x1xf32>
    %51 = tpu.iota {dimensions = array<i32: 2>} : vector<4x17x3xi32>
    %c0_i32 = arith.constant 0 : i32
    %52 = vector.broadcast %c0_i32 : i32 to vector<4x17x3xi32>
    %53 = arith.cmpi eq, %51, %52 : vector<4x17x3xi32>
    %c1_i32 = arith.constant 1 : i32
    %54 = vector.broadcast %c1_i32 : i32 to vector<4x17x3xi32>
    %55 = arith.cmpi eq, %51, %54 : vector<4x17x3xi32>
    %56 = vector.shape_cast %50 : vector<4x17x1xf32> to vector<4x17x1xf32>
    %57 = vector.broadcast %56 : vector<4x17x1xf32> to vector<4x17x3xf32>
    %58 = vector.shape_cast %30 : vector<4x17x1xf32> to vector<4x17x1xf32>
    %59 = vector.broadcast %58 : vector<4x17x1xf32> to vector<4x17x3xf32>
    %60 = arith.select %55, %57, %59 : vector<4x17x3xi1>, vector<4x17x3xf32>
    %61 = vector.shape_cast %49 : vector<4x17x1xf32> to vector<4x17x1xf32>
    %62 = vector.broadcast %61 : vector<4x17x1xf32> to vector<4x17x3xf32>
    %63 = arith.select %53, %62, %60 : vector<4x17x3xi1>, vector<4x17x3xf32>
    %c0_20 = arith.constant 0 : index
    %c0_21 = arith.constant 0 : index
    %c0_22 = arith.constant 0 : index
    %64 = vector.load %arg6[%c0_20, %c0_21, %c0_22] : memref<4x17x3xf32, #tpu.memory_space<vmem>>, vector<4x17x3xf32>
    tpu.vector_store %arg6[%c0_20, %c0_21, %c0_22], %63 {strides = array<i32>} : memref<4x17x3xf32, #tpu.memory_space<vmem>>, vector<4x17x3xf32>,
    return
  }
  func.func @transform_0(%arg0: i32) -> (i32, i32, i32) {
    %c0_i32 = arith.constant 0 : i32
    %c0_i32_0 = arith.constant 0 : i32
    %c0_i32_1 = arith.constant 0 : i32
    return %arg0, %c0_i32, %c0_i32_0 : i32, i32, i32
  }
  func.func @transform_1(%arg0: i32) -> (i32, i32, i32) {
    %c0_i32 = arith.constant 0 : i32
    %c0_i32_0 = arith.constant 0 : i32
    %c0_i32_1 = arith.constant 0 : i32
    %c0_i32_2 = arith.constant 0 : i32
    return %c0_i32, %c0_i32_0, %c0_i32_1 : i32, i32, i32
  }
  func.func @transform_2(%arg0: i32) -> (i32, i32, i32) {
    %c0_i32 = arith.constant 0 : i32
    %c0_i32_0 = arith.constant 0 : i32
    %c0_i32_1 = arith.constant 0 : i32
    %c0_i32_2 = arith.constant 0 : i32
    return %c0_i32, %c0_i32_0, %c0_i32_1 : i32, i32, i32
  }
  func.func @transform_3(%arg0: i32) -> (i32, i32, i32) {
    %c0_i32 = arith.constant 0 : i32
    %c0_i32_0 = arith.constant 0 : i32
    %c0_i32_1 = arith.constant 0 : i32
    %c0_i32_2 = arith.constant 0 : i32
    return %c0_i32, %c0_i32_0, %c0_i32_1 : i32, i32, i32
  }
  func.func @transform_4(%arg0: i32) -> (i32, i32, i32) {
    %c0_i32 = arith.constant 0 : i32
    %c0_i32_0 = arith.constant 0 : i32
    %c0_i32_1 = arith.constant 0 : i32
    %c0_i32_2 = arith.constant 0 : i32
    return %c0_i32, %c0_i32_0, %c0_i32_1 : i32, i32, i32
  }
  func.func @transform_5(%arg0: i32) -> (i32, i32, i32) {
    %c0_i32 = arith.constant 0 : i32
    %c0_i32_0 = arith.constant 0 : i32
    %c0_i32_1 = arith.constant 0 : i32
    return %arg0, %c0_i32, %c0_i32_0 : i32, i32, i32
  }
}

</mosaic_0001>

<llo_original>
// kernel: alg_pose3d_pre_triangulation.1
$region0: #{alg_pose3d_pre_triangulation.1}
  #allocation0 [shape = 'u32[]', space=smem, size = 0x4, offset = 0x4, fixed_abs, tag = 'smem constant byte address 0x4 - core index']
  #allocation1 [shape = 'u32[144,128]{1,0:T(1,128)}', space=vmem, size = 0x12000, scoped, tag = 'internal scratch']
  %s0 = inlined_call_operand.vmem [shape: f32[4,3,256], index: 0, kind: input, shape index: {}]
  %s1 = inlined_call_operand.vmem [shape: f32[3,17,1], index: 1, kind: input, shape index: {}]
  %s2 = inlined_call_operand.vmem [shape: f32[1,17,1], index: 2, kind: input, shape index: {}]
  %s3 = inlined_call_operand.vmem [shape: f32[1,1,256], index: 3, kind: input, shape index: {}]
  %s4 = inlined_call_operand.vmem [shape: f32[1,1,256], index: 4, kind: input, shape index: {}]
  %s5 = inlined_call_operand.vmem [shape: f32[4,17,3], index: 5, kind: output, shape index: {}]
  %s6 = sld [smem:[#allocation0]]
  $region30: #{alg_pose3d_pre_triangulation.1} parent=0
    _
  %s8 = ssub.s32 1, %s6
  %s9 = scalar_select 0, %s8, %s6
  // Predicated region
  $region2: #{alg_pose3d_pre_triangulation.1} parent=0 // pred_check
    _
  $region3: #{alg_pose3d_pre_triangulation.1} parent=0 // pred_check_branch
    %11 = sbr.rel (0) target = $region5
  $region4: #{alg_pose3d_pre_triangulation.1} parent=0 // pred_region
    _
  $region5: #{alg_pose3d_pre_triangulation.1} parent=0 // pred_fallthru
    _
  // Predicated region
  $region6: #{alg_pose3d_pre_triangulation.1} parent=0 // pred_check
    _
  $region7: #{alg_pose3d_pre_triangulation.1} parent=0 // pred_check_branch
    %13 = sbr.rel (0) target = $region9
  $region8: #{alg_pose3d_pre_triangulation.1} parent=0 // pred_region
    _
  $region9: #{alg_pose3d_pre_triangulation.1} parent=0 // pred_fallthru
    _
  // Predicated region
  $region10: #{alg_pose3d_pre_triangulation.1} parent=0 // pred_check
    _
  $region11: #{alg_pose3d_pre_triangulation.1} parent=0 // pred_check_branch
    %15 = sbr.rel (0) target = $region13
  $region12: #{alg_pose3d_pre_triangulation.1} parent=0 // pred_region
    _
  $region13: #{alg_pose3d_pre_triangulation.1} parent=0 // pred_fallthru
    _
  // Predicated region
  $region14: #{alg_pose3d_pre_triangulation.1} parent=0 // pred_check
    _
  $region15: #{alg_pose3d_pre_triangulation.1} parent=0 // pred_check_branch
    %17 = sbr.rel (0) target = $region17
  $region16: #{alg_pose3d_pre_triangulation.1} parent=0 // pred_region
    _
  $region17: #{alg_pose3d_pre_triangulation.1} parent=0 // pred_fallthru
    _
  // Predicated region
  $region18: #{alg_pose3d_pre_triangulation.1} parent=0 // pred_check
    _
  $region19: #{alg_pose3d_pre_triangulation.1} parent=0 // pred_check_branch
    %19 = sbr.rel (0) target = $region21
  $region20: #{alg_pose3d_pre_triangulation.1} parent=0 // pred_region
    _
  $region21: #{alg_pose3d_pre_triangulation.1} parent=0 // pred_fallthru
    _
  %v20 = vld [vmem:[%s0] sm:$0x77]
  %v21 = vld [vmem:[%s0 + $0x8] sm:$0x77]
  %v22 = vld [vmem:[%s0 + $0x10] sm:$0x77]
  %v23 = vld [vmem:[%s0 + $0x18] sm:$0x77]
  %v24 = vld [vmem:[%s1] sm:$0xff]
  %v25 = vld [vmem:[%s1 + $0x8] sm:$0xff]
  %v26 = vld [vmem:[%s1 + $0x10] sm:$0x1]
  %v27 = vld [vmem:[%s1 + $0x18] sm:$0xff]
  %v28 = vld [vmem:[%s1 + $0x20] sm:$0xff]
  %v29 = vld [vmem:[%s1 + $0x28] sm:$0x1]
  %v30 = vld [vmem:[%s1 + $0x30] sm:$0xff]
  %v31 = vld [vmem:[%s1 + $0x38] sm:$0xff]
  %v32 = vld [vmem:[%s1 + $0x40] sm:$0x1]
  %34 = vset.pattern.permute.xlu0 0
  %35 = vperm.xlu0 %34, %v24
  %v36 = vpop.permute.xlu0 %35
  %39 = vset.pattern.permute.xlu0 0
  %40 = vperm.xlu0 %39, %v25
  %v41 = vpop.permute.xlu0 %40
  %44 = vset.pattern.permute.xlu0 0
  %45 = vperm.xlu0 %44, %v26
  %v46 = vpop.permute.xlu0 %45
  %v52 = vlaneseq
  %v53 = vshrl.u32 %v52, 7
  %v54 = vsub.s32 0, %v53
  %v55 = vrot.slane %v20, %v54
  %v56 = vlaneseq
  %v57 = vshrl.u32 %v56, 7
  %v58 = vsub.s32 4, %v57
  %v59 = vrot.slane %v20, %v58
  %v60 = vlaneseq
  %v61 = vshrl.u32 %v60, 7
  %v62 = vsub.s32 0, %v61
  %v63 = vrot.slane %v21, %v62
  %v64 = vlaneseq
  %v65 = vshrl.u32 %v64, 7
  %v66 = vsub.s32 4, %v65
  %v67 = vrot.slane %v21, %v66
  %v68 = vlaneseq
  %v69 = vshrl.u32 %v68, 7
  %v70 = vsub.s32 0, %v69
  %v71 = vrot.slane %v22, %v70
  %v72 = vlaneseq
  %v73 = vshrl.u32 %v72, 7
  %v74 = vsub.s32 4, %v73
  %v75 = vrot.slane %v22, %v74
  %v76 = vlaneseq
  %v77 = vshrl.u32 %v76, 7
  %v78 = vsub.s32 0, %v77
  %v79 = vrot.slane %v23, %v78
  %v80 = vlaneseq
  %v81 = vshrl.u32 %v80, 7
  %v82 = vsub.s32 4, %v81
  %v83 = vrot.slane %v23, %v82
  %v92 = vlaneseq
  %v93 = vshrl.u32 %v92, 7
  %v94 = vsub.s32 0, %v93
  %v95 = vrot.slane %v55, %v94
  %v96 = vlaneseq
  %v97 = vshrl.u32 %v96, 7
  %v98 = vsub.s32 0, %v97
  %v99 = vrot.slane %v59, %v98
  %v100 = vlaneseq
  %v101 = vshrl.u32 %v100, 7
  %v102 = vsub.s32 0, %v101
  %v103 = vrot.slane %v63, %v102
  %v104 = vlaneseq
  %v105 = vshrl.u32 %v104, 7
  %v106 = vsub.s32 0, %v105
  %v107 = vrot.slane %v67, %v106
  %v108 = vlaneseq
  %v109 = vshrl.u32 %v108, 7
  %v110 = vsub.s32 0, %v109
  %v111 = vrot.slane %v71, %v110
  %v112 = vlaneseq
  %v113 = vshrl.u32 %v112, 7
  %v114 = vsub.s32 0, %v113
  %v115 = vrot.slane %v75, %v114
  %v116 = vlaneseq
  %v117 = vshrl.u32 %v116, 7
  %v118 = vsub.s32 0, %v117
  %v119 = vrot.slane %v79, %v118
  %v120 = vlaneseq
  %v121 = vshrl.u32 %v120, 7
  %v122 = vsub.s32 0, %v121
  %v123 = vrot.slane %v83, %v122
  %v124 = vmul.f32 %v36, %v95
  %v125 = vmul.f32 %v36, %v99
  %v126 = vmul.f32 %v41, %v95
  %v127 = vmul.f32 %v41, %v99
  %v128 = vmul.f32 %v46, %v95
  %v129 = vmul.f32 %v46, %v99
  %v130 = vmul.f32 %v36, %v103
  %v131 = vmul.f32 %v36, %v107
  %v132 = vmul.f32 %v41, %v103
  %v133 = vmul.f32 %v41, %v107
  %v134 = vmul.f32 %v46, %v103
  %v135 = vmul.f32 %v46, %v107
  %v136 = vmul.f32 %v36, %v111
  %v137 = vmul.f32 %v36, %v115
  %v138 = vmul.f32 %v41, %v111
  %v139 = vmul.f32 %v41, %v115
  %v140 = vmul.f32 %v46, %v111
  %v141 = vmul.f32 %v46, %v115
  %v142 = vmul.f32 %v36, %v119
  %v143 = vmul.f32 %v36, %v123
  %v144 = vmul.f32 %v41, %v119
  %v145 = vmul.f32 %v41, %v123
  %v146 = vmul.f32 %v46, %v119
  %v147 = vmul.f32 %v46, %v123
  %149 = vset.pattern.permute.xlu0 0
  %150 = vperm.xlu0 %149, %v27
  %v151 = vpop.permute.xlu0 %150
  %154 = vset.pattern.permute.xlu0 0
  %155 = vperm.xlu0 %154, %v28
  %v156 = vpop.permute.xlu0 %155
  %159 = vset.pattern.permute.xlu0 0
  %160 = vperm.xlu0 %159, %v29
  %v161 = vpop.permute.xlu0 %160
  %v163 = vlaneseq
  %v164 = vshrl.u32 %v163, 7
  %v165 = vsub.s32 1, %v164
  %v166 = vrot.slane %v20, %v165
  %v167 = vlaneseq
  %v168 = vshrl.u32 %v167, 7
  %v169 = vsub.s32 5, %v168
  %v170 = vrot.slane %v20, %v169
  %v171 = vlaneseq
  %v172 = vshrl.u32 %v171, 7
  %v173 = vsub.s32 1, %v172
  %v174 = vrot.slane %v21, %v173
  %v175 = vlaneseq
  %v176 = vshrl.u32 %v175, 7
  %v177 = vsub.s32 5, %v176
  %v178 = vrot.slane %v21, %v177
  %v179 = vlaneseq
  %v180 = vshrl.u32 %v179, 7
  %v181 = vsub.s32 1, %v180
  %v182 = vrot.slane %v22, %v181
  %v183 = vlaneseq
  %v184 = vshrl.u32 %v183, 7
  %v185 = vsub.s32 5, %v184
  %v186 = vrot.slane %v22, %v185
  %v187 = vlaneseq
  %v188 = vshrl.u32 %v187, 7
  %v189 = vsub.s32 1, %v188
  %v190 = vrot.slane %v23, %v189
  %v191 = vlaneseq
  %v192 = vshrl.u32 %v191, 7
  %v193 = vsub.s32 5, %v192
  %v194 = vrot.slane %v23, %v193
  %v203 = vlaneseq
  %v204 = vshrl.u32 %v203, 7
  %v205 = vsub.s32 1, %v204
  %v206 = vrot.slane %v166, %v205
  %v207 = vlaneseq
  %v208 = vshrl.u32 %v207, 7
  %v209 = vsub.s32 1, %v208
  %v210 = vrot.slane %v170, %v209
  %v211 = vlaneseq
  %v212 = vshrl.u32 %v211, 7
  %v213 = vsub.s32 1, %v212
  %v214 = vrot.slane %v174, %v213
  %v215 = vlaneseq
  %v216 = vshrl.u32 %v215, 7
  %v217 = vsub.s32 1, %v216
  %v218 = vrot.slane %v178, %v217
  %v219 = vlaneseq
  %v220 = vshrl.u32 %v219, 7
  %v221 = vsub.s32 1, %v220
  %v222 = vrot.slane %v182, %v221
  %v223 = vlaneseq
  %v224 = vshrl.u32 %v223, 7
  %v225 = vsub.s32 1, %v224
  %v226 = vrot.slane %v186, %v225
  %v227 = vlaneseq
  %v228 = vshrl.u32 %v227, 7
  %v229 = vsub.s32 1, %v228
  %v230 = vrot.slane %v190, %v229
  %v231 = vlaneseq
  %v232 = vshrl.u32 %v231, 7
  %v233 = vsub.s32 1, %v232
  %v234 = vrot.slane %v194, %v233
  %v235 = vmul.f32 %v151, %v206
  %v236 = vmul.f32 %v151, %v210
  %v237 = vmul.f32 %v156, %v206
  %v238 = vmul.f32 %v156, %v210
  %v239 = vmul.f32 %v161, %v206
  %v240 = vmul.f32 %v161, %v210
  %v241 = vmul.f32 %v151, %v214
  %v242 = vmul.f32 %v151, %v218
  %v243 = vmul.f32 %v156, %v214
  %v244 = vmul.f32 %v156, %v218
  %v245 = vmul.f32 %v161, %v214
  %v246 = vmul.f32 %v161, %v218
  %v247 = vmul.f32 %v151, %v222
  %v248 = vmul.f32 %v151, %v226
  %v249 = vmul.f32 %v156, %v222
  %v250 = vmul.f32 %v156, %v226
  %v251 = vmul.f32 %v161, %v222
  %v252 = vmul.f32 %v161, %v226
  %v253 = vmul.f32 %v151, %v230
  %v254 = vmul.f32 %v151, %v234
  %v255 = vmul.f32 %v156, %v230
  %v256 = vmul.f32 %v156, %v234
  %v257 = vmul.f32 %v161, %v230
  %v258 = vmul.f32 %v161, %v234
  %v259 = vadd.f32 %v124, %v235
  %v260 = vadd.f32 %v125, %v236
  %v261 = vadd.f32 %v126, %v237
  %v262 = vadd.f32 %v127, %v238
  %v263 = vadd.f32 %v128, %v239
  %v264 = vadd.f32 %v129, %v240
  %v265 = vadd.f32 %v130, %v241
  %v266 = vadd.f32 %v131, %v242
  %v267 = vadd.f32 %v132, %v243
  %v268 = vadd.f32 %v133, %v244
  %v269 = vadd.f32 %v134, %v245
  %v270 = vadd.f32 %v135, %v246
  %v271 = vadd.f32 %v136, %v247
  %v272 = vadd.f32 %v137, %v248
  %v273 = vadd.f32 %v138, %v249
  %v274 = vadd.f32 %v139, %v250
  %v275 = vadd.f32 %v140, %v251
  %v276 = vadd.f32 %v141, %v252
  %v277 = vadd.f32 %v142, %v253
  %v278 = vadd.f32 %v143, %v254
  %v279 = vadd.f32 %v144, %v255
  %v280 = vadd.f32 %v145, %v256
  %v281 = vadd.f32 %v146, %v257
  %v282 = vadd.f32 %v147, %v258
  %284 = vset.pattern.permute.xlu0 0
  %285 = vperm.xlu0 %284, %v30
  %v286 = vpop.permute.xlu0 %285
  %289 = vset.pattern.permute.xlu0 0
  %290 = vperm.xlu0 %289, %v31
  %v291 = vpop.permute.xlu0 %290
  %294 = vset.pattern.permute.xlu0 0
  %295 = vperm.xlu0 %294, %v32
  %v296 = vpop.permute.xlu0 %295
  %v298 = vlaneseq
  %v299 = vshrl.u32 %v298, 7
  %v300 = vsub.s32 2, %v299
  %v301 = vrot.slane %v20, %v300
  %v302 = vlaneseq
  %v303 = vshrl.u32 %v302, 7
  %v304 = vsub.s32 6, %v303
  %v305 = vrot.slane %v20, %v304
  %v306 = vlaneseq
  %v307 = vshrl.u32 %v306, 7
  %v308 = vsub.s32 2, %v307
  %v309 = vrot.slane %v21, %v308
  %v310 = vlaneseq
  %v311 = vshrl.u32 %v310, 7
  %v312 = vsub.s32 6, %v311
  %v313 = vrot.slane %v21, %v312
  %v314 = vlaneseq
  %v315 = vshrl.u32 %v314, 7
  %v316 = vsub.s32 2, %v315
  %v317 = vrot.slane %v22, %v316
  %v318 = vlaneseq
  %v319 = vshrl.u32 %v318, 7
  %v320 = vsub.s32 6, %v319
  %v321 = vrot.slane %v22, %v320
  %v322 = vlaneseq
  %v323 = vshrl.u32 %v322, 7
  %v324 = vsub.s32 2, %v323
  %v325 = vrot.slane %v23, %v324
  %v326 = vlaneseq
  %v327 = vshrl.u32 %v326, 7
  %v328 = vsub.s32 6, %v327
  %v329 = vrot.slane %v23, %v328
  %v338 = vlaneseq
  %v339 = vshrl.u32 %v338, 7
  %v340 = vsub.s32 2, %v339
  %v341 = vrot.slane %v301, %v340
  %v342 = vlaneseq
  %v343 = vshrl.u32 %v342, 7
  %v344 = vsub.s32 2, %v343
  %v345 = vrot.slane %v305, %v344
  %v346 = vlaneseq
  %v347 = vshrl.u32 %v346, 7
  %v348 = vsub.s32 2, %v347
  %v349 = vrot.slane %v309, %v348
  %v350 = vlaneseq
  %v351 = vshrl.u32 %v350, 7
  %v352 = vsub.s32 2, %v351
  %v353 = vrot.slane %v313, %v352
  %v354 = vlaneseq
  %v355 = vshrl.u32 %v354, 7
  %v356 = vsub.s32 2, %v355
  %v357 = vrot.slane %v317, %v356
  %v358 = vlaneseq
  %v359 = vshrl.u32 %v358, 7
  %v360 = vsub.s32 2, %v359
  %v361 = vrot.slane %v321, %v360
  %v362 = vlaneseq
  %v363 = vshrl.u32 %v362, 7
  %v364 = vsub.s32 2, %v363
  %v365 = vrot.slane %v325, %v364
  %v366 = vlaneseq
  %v367 = vshrl.u32 %v366, 7
  %v368 = vsub.s32 2, %v367
  %v369 = vrot.slane %v329, %v368
  %v370 = vmul.f32 %v286, %v341
  %v371 = vmul.f32 %v286, %v345
  %v372 = vmul.f32 %v291, %v341
  %v373 = vmul.f32 %v291, %v345
  %v374 = vmul.f32 %v296, %v341
  %v375 = vmul.f32 %v296, %v345
  %v376 = vmul.f32 %v286, %v349
  %v377 = vmul.f32 %v286, %v353
  %v378 = vmul.f32 %v291, %v349
  %v379 = vmul.f32 %v291, %v353
  %v380 = vmul.f32 %v296, %v349
  %v381 = vmul.f32 %v296, %v353
  %v382 = vmul.f32 %v286, %v357
  %v383 = vmul.f32 %v286, %v361
  %v384 = vmul.f32 %v291, %v357
  %v385 = vmul.f32 %v291, %v361
  %v386 = vmul.f32 %v296, %v357
  %v387 = vmul.f32 %v296, %v361
  %v388 = vmul.f32 %v286, %v365
  %v389 = vmul.f32 %v286, %v369
  %v390 = vmul.f32 %v291, %v365
  %v391 = vmul.f32 %v291, %v369
  %v392 = vmul.f32 %v296, %v365
  %v393 = vmul.f32 %v296, %v369
  %v394 = vadd.f32 %v259, %v370
  %v395 = vadd.f32 %v260, %v371
  %v396 = vadd.f32 %v261, %v372
  %v397 = vadd.f32 %v262, %v373
  %v398 = vadd.f32 %v263, %v374
  %v399 = vadd.f32 %v264, %v375
  %v400 = vadd.f32 %v265, %v376
  %v401 = vadd.f32 %v266, %v377
  %v402 = vadd.f32 %v267, %v378
  %v403 = vadd.f32 %v268, %v379
  %v404 = vadd.f32 %v269, %v380
  %v405 = vadd.f32 %v270, %v381
  %v406 = vadd.f32 %v271, %v382
  %v407 = vadd.f32 %v272, %v383
  %v408 = vadd.f32 %v273, %v384
  %v409 = vadd.f32 %v274, %v385
  %v410 = vadd.f32 %v275, %v386
  %v411 = vadd.f32 %v276, %v387
  %v412 = vadd.f32 %v277, %v388
  %v413 = vadd.f32 %v278, %v389
  %v414 = vadd.f32 %v279, %v390
  %v415 = vadd.f32 %v280, %v391
  %v416 = vadd.f32 %v281, %v392
  %v417 = vadd.f32 %v282, %v393
  %v418 = vadd.f32 %v394, %v395
  %419 = vadd.xlane.f32.xlu0 %v418
  %v420 = vpop.xlane.xlu0 %419
  %v421 = vadd.f32 %v396, %v397
  %422 = vadd.xlane.f32.xlu0 %v421
  %v423 = vpop.xlane.xlu0 %422
  %vm424 = vcmask 1040384
  %v425 = vsel %vm424, %v398, 0.0
  %v426 = vsel %vm424, %v399, 0.0
  %v427 = vadd.f32 %v425, %v426
  %428 = vadd.xlane.f32.xlu0 %v427
  %v429 = vpop.xlane.xlu0 %428
  %v430 = vadd.f32 %v400, %v401
  %431 = vadd.xlane.f32.xlu0 %v430
  %v432 = vpop.xlane.xlu0 %431
  %v433 = vadd.f32 %v402, %v403
  %434 = vadd.xlane.f32.xlu0 %v433
  %v435 = vpop.xlane.xlu0 %434
  %v436 = vsel %vm424, %v404, 0.0
  %v437 = vsel %vm424, %v405, 0.0
  %v438 = vadd.f32 %v436, %v437
  %439 = vadd.xlane.f32.xlu0 %v438
  %v440 = vpop.xlane.xlu0 %439
  %v441 = vadd.f32 %v406, %v407
  %442 = vadd.xlane.f32.xlu0 %v441
  %v443 = vpop.xlane.xlu0 %442
  %v444 = vadd.f32 %v408, %v409
  %445 = vadd.xlane.f32.xlu0 %v444
  %v446 = vpop.xlane.xlu0 %445
  %v447 = vsel %vm424, %v410, 0.0
  %v448 = vsel %vm424, %v411, 0.0
  %v449 = vadd.f32 %v447, %v448
  %450 = vadd.xlane.f32.xlu0 %v449
  %v451 = vpop.xlane.xlu0 %450
  %v452 = vadd.f32 %v412, %v413
  %453 = vadd.xlane.f32.xlu0 %v452
  %v454 = vpop.xlane.xlu0 %453
  %v455 = vadd.f32 %v414, %v415
  %456 = vadd.xlane.f32.xlu0 %v455
  %v457 = vpop.xlane.xlu0 %456
  %v458 = vsel %vm424, %v416, 0.0
  %v459 = vsel %vm424, %v417, 0.0
  %v460 = vadd.f32 %v458, %v459
  %461 = vadd.xlane.f32.xlu0 %v460
  %v462 = vpop.xlane.xlu0 %461
  %v463 = vmul.f32 %v420, 3.90625e-05
  %v464 = vmul.f32 %v423, 3.90625e-05
  %v465 = vmul.f32 %v429, 3.90625e-05
  %v466 = vmul.f32 %v432, 3.90625e-05
  %v467 = vmul.f32 %v435, 3.90625e-05
  %v468 = vmul.f32 %v440, 3.90625e-05
  %v469 = vmul.f32 %v443, 3.90625e-05
  %v470 = vmul.f32 %v446, 3.90625e-05
  %v471 = vmul.f32 %v451, 3.90625e-05
  %v472 = vmul.f32 %v454, 3.90625e-05
  %v473 = vmul.f32 %v457, 3.90625e-05
  %v474 = vmul.f32 %v462, 3.90625e-05
  %v475 = vld [vmem:[%s2] sm:$0xff]
  %v476 = vld [vmem:[%s2 + $0x8] sm:$0xff]
  %v477 = vld [vmem:[%s2 + $0x10] sm:$0x1]
  %v478 = vadd.f32 %v463, %v475
  %v479 = vadd.f32 %v464, %v476
  %v480 = vadd.f32 %v465, %v477
  %v481 = vadd.f32 %v466, %v475
  %v482 = vadd.f32 %v467, %v476
  %v483 = vadd.f32 %v468, %v477
  %v484 = vadd.f32 %v469, %v475
  %v485 = vadd.f32 %v470, %v476
  %v486 = vadd.f32 %v471, %v477
  %v487 = vadd.f32 %v472, %v475
  %v488 = vadd.f32 %v473, %v476
  %v489 = vadd.f32 %v474, %v477
  %v490 = vxor.u32 %v478, 2147483648
  %v491 = vxor.u32 %v479, 2147483648
  %v492 = vxor.u32 %v480, 2147483648
  %v493 = vxor.u32 %v481, 2147483648
  %v494 = vxor.u32 %v482, 2147483648
  %v495 = vxor.u32 %v483, 2147483648
  %v496 = vxor.u32 %v484, 2147483648
  %v497 = vxor.u32 %v485, 2147483648
  %v498 = vxor.u32 %v486, 2147483648
  %v499 = vxor.u32 %v487, 2147483648
  %v500 = vxor.u32 %v488, 2147483648
  %v501 = vxor.u32 %v489, 2147483648
  %v502 = vmul.f32 %v490, 1.442695
  %v503 = vpow.pop %v502
  %v504 = vmul.f32 %v491, 1.442695
  %v505 = vpow.pop %v504
  %v506 = vmul.f32 %v492, 1.442695
  %v507 = vpow.pop %v506
  %v508 = vmul.f32 %v493, 1.442695
  %v509 = vpow.pop %v508
  %v510 = vmul.f32 %v494, 1.442695
  %v511 = vpow.pop %v510
  %v512 = vmul.f32 %v495, 1.442695
  %v513 = vpow.pop %v512
  %v514 = vmul.f32 %v496, 1.442695
  %v515 = vpow.pop %v514
  %v516 = vmul.f32 %v497, 1.442695
  %v517 = vpow.pop %v516
  %v518 = vmul.f32 %v498, 1.442695
  %v519 = vpow.pop %v518
  %v520 = vmul.f32 %v499, 1.442695
  %v521 = vpow.pop %v520
  %v522 = vmul.f32 %v500, 1.442695
  %v523 = vpow.pop %v522
  %v524 = vmul.f32 %v501, 1.442695
  %v525 = vpow.pop %v524
  %v526 = vadd.f32 %v503, 1.0
  %v527 = vadd.f32 %v505, 1.0
  %v528 = vadd.f32 %v507, 1.0
  %v529 = vadd.f32 %v509, 1.0
  %v530 = vadd.f32 %v511, 1.0
  %v531 = vadd.f32 %v513, 1.0
  %v532 = vadd.f32 %v515, 1.0
  %v533 = vadd.f32 %v517, 1.0
  %v534 = vadd.f32 %v519, 1.0
  %v535 = vadd.f32 %v521, 1.0
  %v536 = vadd.f32 %v523, 1.0
  %v537 = vadd.f32 %v525, 1.0
  %v538 = vrcp.pop %v526
  %v539 = vmul.f32 1.0, %v538
  %v540 = vrcp.pop %v527
  %v541 = vmul.f32 1.0, %v540
  %v542 = vrcp.pop %v528
  %v543 = vmul.f32 1.0, %v542
  %v544 = vrcp.pop %v529
  %v545 = vmul.f32 1.0, %v544
  %v546 = vrcp.pop %v530
  %v547 = vmul.f32 1.0, %v546
  %v548 = vrcp.pop %v531
  %v549 = vmul.f32 1.0, %v548
  %v550 = vrcp.pop %v532
  %v551 = vmul.f32 1.0, %v550
  %v552 = vrcp.pop %v533
  %v553 = vmul.f32 1.0, %v552
  %v554 = vrcp.pop %v534
  %v555 = vmul.f32 1.0, %v554
  %v556 = vrcp.pop %v535
  %v557 = vmul.f32 1.0, %v556
  %v558 = vrcp.pop %v536
  %v559 = vmul.f32 1.0, %v558
  %v560 = vrcp.pop %v537
  %v561 = vmul.f32 1.0, %v560
  %v562 = vmax.f32 %v394, %v395
  %563 = vmax.xlane.f32.xlu0 %v562
  %v564 = vpop.xlane.xlu0 %563
  %v565 = vmax.f32 %v396, %v397
  %566 = vmax.xlane.f32.xlu0 %v565
  %v567 = vpop.xlane.xlu0 %566
  %v568 = vsel %vm424, %v398, -inf
  %v569 = vsel %vm424, %v399, -inf
  %v570 = vmax.f32 %v568, %v569
  %571 = vmax.xlane.f32.xlu0 %v570
  %v572 = vpop.xlane.xlu0 %571
  %v573 = vmax.f32 %v400, %v401
  %574 = vmax.xlane.f32.xlu0 %v573
  %v575 = vpop.xlane.xlu0 %574
  %v576 = vmax.f32 %v402, %v403
  %577 = vmax.xlane.f32.xlu0 %v576
  %v578 = vpop.xlane.xlu0 %577
  %v579 = vsel %vm424, %v404, -inf
  %v580 = vsel %vm424, %v405, -inf
  %v581 = vmax.f32 %v579, %v580
  %582 = vmax.xlane.f32.xlu0 %v581
  %v583 = vpop.xlane.xlu0 %582
  %v584 = vmax.f32 %v406, %v407
  %585 = vmax.xlane.f32.xlu0 %v584
  %v586 = vpop.xlane.xlu0 %585
  %v587 = vmax.f32 %v408, %v409
  %588 = vmax.xlane.f32.xlu0 %v587
  %v589 = vpop.xlane.xlu0 %588
  %v590 = vsel %vm424, %v410, -inf
  %v591 = vsel %vm424, %v411, -inf
  %v592 = vmax.f32 %v590, %v591
  %593 = vmax.xlane.f32.xlu0 %v592
  %v594 = vpop.xlane.xlu0 %593
  %v595 = vmax.f32 %v412, %v413
  %596 = vmax.xlane.f32.xlu0 %v595
  %v597 = vpop.xlane.xlu0 %596
  %v598 = vmax.f32 %v414, %v415
  %599 = vmax.xlane.f32.xlu0 %v598
  %v600 = vpop.xlane.xlu0 %599
  %v601 = vsel %vm424, %v416, -inf
  %v602 = vsel %vm424, %v417, -inf
  %v603 = vmax.f32 %v601, %v602
  %604 = vmax.xlane.f32.xlu0 %v603
  %v605 = vpop.xlane.xlu0 %604
  %v606 = vsub.f32 %v394, %v564
  %v607 = vsub.f32 %v395, %v564
  %v608 = vsub.f32 %v396, %v567
  %v609 = vsub.f32 %v397, %v567
  %v610 = vsub.f32 %v398, %v572
  %v611 = vsub.f32 %v399, %v572
  %v612 = vsub.f32 %v400, %v575
  %v613 = vsub.f32 %v401, %v575
  %v614 = vsub.f32 %v402, %v578
  %v615 = vsub.f32 %v403, %v578
  %v616 = vsub.f32 %v404, %v583
  %v617 = vsub.f32 %v405, %v583
  %v618 = vsub.f32 %v406, %v586
  %v619 = vsub.f32 %v407, %v586
  %v620 = vsub.f32 %v408, %v589
  %v621 = vsub.f32 %v409, %v589
  %v622 = vsub.f32 %v410, %v594
  %v623 = vsub.f32 %v411, %v594
  %v624 = vsub.f32 %v412, %v597
  %v625 = vsub.f32 %v413, %v597
  %v626 = vsub.f32 %v414, %v600
  %v627 = vsub.f32 %v415, %v600
  %v628 = vsub.f32 %v416, %v605
  %v629 = vsub.f32 %v417, %v605
  %v630 = vmul.f32 %v606, 1.442695
  %v631 = vpow.pop %v630
  %v632 = vmul.f32 %v607, 1.442695
  %v633 = vpow.pop %v632
  %v634 = vmul.f32 %v608, 1.442695
  %v635 = vpow.pop %v634
  %v636 = vmul.f32 %v609, 1.442695
  %v637 = vpow.pop %v636
  %v638 = vmul.f32 %v610, 1.442695
  %v639 = vpow.pop %v638
  %v640 = vmul.f32 %v611, 1.442695
  %v641 = vpow.pop %v640
  %v642 = vmul.f32 %v612, 1.442695
  %v643 = vpow.pop %v642
  %v644 = vmul.f32 %v613, 1.442695
  %v645 = vpow.pop %v644
  %v646 = vmul.f32 %v614, 1.442695
  %v647 = vpow.pop %v646
  %v648 = vmul.f32 %v615, 1.442695
  %v649 = vpow.pop %v648
  %v650 = vmul.f32 %v616, 1.442695
  %v651 = vpow.pop %v650
  %v652 = vmul.f32 %v617, 1.442695
  %v653 = vpow.pop %v652
  %v654 = vmul.f32 %v618, 1.442695
  %v655 = vpow.pop %v654
  %v656 = vmul.f32 %v619, 1.442695
  %v657 = vpow.pop %v656
  %v658 = vmul.f32 %v620, 1.442695
  %v659 = vpow.pop %v658
  %v660 = vmul.f32 %v621, 1.442695
  %v661 = vpow.pop %v660
  %v662 = vmul.f32 %v622, 1.442695
  %v663 = vpow.pop %v662
  %v664 = vmul.f32 %v623, 1.442695
  %v665 = vpow.pop %v664
  %v666 = vmul.f32 %v624, 1.442695
  %v667 = vpow.pop %v666
  %v668 = vmul.f32 %v625, 1.442695
  %v669 = vpow.pop %v668
  %v670 = vmul.f32 %v626, 1.442695
  %v671 = vpow.pop %v670
  %v672 = vmul.f32 %v627, 1.442695
  %v673 = vpow.pop %v672
  %v674 = vmul.f32 %v628, 1.442695
  %v675 = vpow.pop %v674
  %v676 = vmul.f32 %v629, 1.442695
  %v677 = vpow.pop %v676
  %v678 = vadd.f32 %v631, %v633
  %679 = vadd.xlane.f32.xlu0 %v678
  %v680 = vpop.xlane.xlu0 %679
  %v681 = vadd.f32 %v635, %v637
  %682 = vadd.xlane.f32.xlu0 %v681
  %v683 = vpop.xlane.xlu0 %682
  %v684 = vsel %vm424, %v639, 0.0
  %v685 = vsel %vm424, %v641, 0.0
  %v686 = vadd.f32 %v684, %v685
  %687 = vadd.xlane.f32.xlu0 %v686
  %v688 = vpop.xlane.xlu0 %687
  %v689 = vadd.f32 %v643, %v645
  %690 = vadd.xlane.f32.xlu0 %v689
  %v691 = vpop.xlane.xlu0 %690
  %v692 = vadd.f32 %v647, %v649
  %693 = vadd.xlane.f32.xlu0 %v692
  %v694 = vpop.xlane.xlu0 %693
  %v695 = vsel %vm424, %v651, 0.0
  %v696 = vsel %vm424, %v653, 0.0
  %v697 = vadd.f32 %v695, %v696
  %698 = vadd.xlane.f32.xlu0 %v697
  %v699 = vpop.xlane.xlu0 %698
  %v700 = vadd.f32 %v655, %v657
  %701 = vadd.xlane.f32.xlu0 %v700
  %v702 = vpop.xlane.xlu0 %701
  %v703 = vadd.f32 %v659, %v661
  %704 = vadd.xlane.f32.xlu0 %v703
  %v705 = vpop.xlane.xlu0 %704
  %v706 = vsel %vm424, %v663, 0.0
  %v707 = vsel %vm424, %v665, 0.0
  %v708 = vadd.f32 %v706, %v707
  %709 = vadd.xlane.f32.xlu0 %v708
  %v710 = vpop.xlane.xlu0 %709
  %v711 = vadd.f32 %v667, %v669
  %712 = vadd.xlane.f32.xlu0 %v711
  %v713 = vpop.xlane.xlu0 %712
  %v714 = vadd.f32 %v671, %v673
  %715 = vadd.xlane.f32.xlu0 %v714
  %v716 = vpop.xlane.xlu0 %715
  %v717 = vsel %vm424, %v675, 0.0
  %v718 = vsel %vm424, %v677, 0.0
  %v719 = vadd.f32 %v717, %v718
  %720 = vadd.xlane.f32.xlu0 %v719
  %v721 = vpop.xlane.xlu0 %720
  %v722 = vld [vmem:[%s3] sm:$0x3]
  %v724 = vlaneseq
  %v725 = vshrl.u32 %v724, 7
  %v726 = vsub.s32 0, %v725
  %v727 = vrot.slane %v722, %v726
  %v728 = vlaneseq
  %v729 = vshrl.u32 %v728, 7
  %v730 = vsub.s32 1, %v729
  %v731 = vrot.slane %v722, %v730
  %v734 = vmul.f32 %v631, %v727
  %v735 = vmul.f32 %v633, %v731
  %v736 = vmul.f32 %v635, %v727
  %v737 = vmul.f32 %v637, %v731
  %v738 = vmul.f32 %v639, %v727
  %v739 = vmul.f32 %v641, %v731
  %v740 = vmul.f32 %v643, %v727
  %v741 = vmul.f32 %v645, %v731
  %v742 = vmul.f32 %v647, %v727
  %v743 = vmul.f32 %v649, %v731
  %v744 = vmul.f32 %v651, %v727
  %v745 = vmul.f32 %v653, %v731
  %v746 = vmul.f32 %v655, %v727
  %v747 = vmul.f32 %v657, %v731
  %v748 = vmul.f32 %v659, %v727
  %v749 = vmul.f32 %v661, %v731
  %v750 = vmul.f32 %v663, %v727
  %v751 = vmul.f32 %v665, %v731
  %v752 = vmul.f32 %v667, %v727
  %v753 = vmul.f32 %v669, %v731
  %v754 = vmul.f32 %v671, %v727
  %v755 = vmul.f32 %v673, %v731
  %v756 = vmul.f32 %v675, %v727
  %v757 = vmul.f32 %v677, %v731
  %v758 = vadd.f32 %v734, %v735
  %759 = vadd.xlane.f32.xlu0 %v758
  %v760 = vpop.xlane.xlu0 %759
  %v761 = vadd.f32 %v736, %v737
  %762 = vadd.xlane.f32.xlu0 %v761
  %v763 = vpop.xlane.xlu0 %762
  %v764 = vsel %vm424, %v738, 0.0
  %v765 = vsel %vm424, %v739, 0.0
  %v766 = vadd.f32 %v764, %v765
  %767 = vadd.xlane.f32.xlu0 %v766
  %v768 = vpop.xlane.xlu0 %767
  %v769 = vadd.f32 %v740, %v741
  %770 = vadd.xlane.f32.xlu0 %v769
  %v771 = vpop.xlane.xlu0 %770
  %v772 = vadd.f32 %v742, %v743
  %773 = vadd.xlane.f32.xlu0 %v772
  %v774 = vpop.xlane.xlu0 %773
  %v775 = vsel %vm424, %v744, 0.0
  %v776 = vsel %vm424, %v745, 0.0
  %v777 = vadd.f32 %v775, %v776
  %778 = vadd.xlane.f32.xlu0 %v777
  %v779 = vpop.xlane.xlu0 %778
  %v780 = vadd.f32 %v746, %v747
  %781 = vadd.xlane.f32.xlu0 %v780
  %v782 = vpop.xlane.xlu0 %781
  %v783 = vadd.f32 %v748, %v749
  %784 = vadd.xlane.f32.xlu0 %v783
  %v785 = vpop.xlane.xlu0 %784
  %v786 = vsel %vm424, %v750, 0.0
  %v787 = vsel %vm424, %v751, 0.0
  %v788 = vadd.f32 %v786, %v787
  %789 = vadd.xlane.f32.xlu0 %v788
  %v790 = vpop.xlane.xlu0 %789
  %v791 = vadd.f32 %v752, %v753
  %792 = vadd.xlane.f32.xlu0 %v791
  %v793 = vpop.xlane.xlu0 %792
  %v794 = vadd.f32 %v754, %v755
  %795 = vadd.xlane.f32.xlu0 %v794
  %v796 = vpop.xlane.xlu0 %795
  %v797 = vsel %vm424, %v756, 0.0
  %v798 = vsel %vm424, %v757, 0.0
  %v799 = vadd.f32 %v797, %v798
  %800 = vadd.xlane.f32.xlu0 %v799
  %v801 = vpop.xlane.xlu0 %800
  %v802 = vld [vmem:[%s4] sm:$0x3]
  %v804 = vlaneseq
  %v805 = vshrl.u32 %v804, 7
  %v806 = vsub.s32 0, %v805
  %v807 = vrot.slane %v802, %v806
  %v808 = vlaneseq
  %v809 = vshrl.u32 %v808, 7
  %v810 = vsub.s32 1, %v809
  %v811 = vrot.slane %v802, %v810
  %v814 = vmul.f32 %v631, %v807
  %v815 = vmul.f32 %v633, %v811
  %v816 = vmul.f32 %v635, %v807
  %v817 = vmul.f32 %v637, %v811
  %v818 = vmul.f32 %v639, %v807
  %v819 = vmul.f32 %v641, %v811
  %v820 = vmul.f32 %v643, %v807
  %v821 = vmul.f32 %v645, %v811
  %v822 = vmul.f32 %v647, %v807
  %v823 = vmul.f32 %v649, %v811
  %v824 = vmul.f32 %v651, %v807
  %v825 = vmul.f32 %v653, %v811
  %v826 = vmul.f32 %v655, %v807
  %v827 = vmul.f32 %v657, %v811
  %v828 = vmul.f32 %v659, %v807
  %v829 = vmul.f32 %v661, %v811
  %v830 = vmul.f32 %v663, %v807
  %v831 = vmul.f32 %v665, %v811
  %v832 = vmul.f32 %v667, %v807
  %v833 = vmul.f32 %v669, %v811
  %v834 = vmul.f32 %v671, %v807
  %v835 = vmul.f32 %v673, %v811
  %v836 = vmul.f32 %v675, %v807
  %v837 = vmul.f32 %v677, %v811
  %v838 = vadd.f32 %v814, %v815
  %839 = vadd.xlane.f32.xlu0 %v838
  %v840 = vpop.xlane.xlu0 %839
  %v841 = vadd.f32 %v816, %v817
  %842 = vadd.xlane.f32.xlu0 %v841
  %v843 = vpop.xlane.xlu0 %842
  %v844 = vsel %vm424, %v818, 0.0
  %v845 = vsel %vm424, %v819, 0.0
  %v846 = vadd.f32 %v844, %v845
  %847 = vadd.xlane.f32.xlu0 %v846
  %v848 = vpop.xlane.xlu0 %847
  %v849 = vadd.f32 %v820, %v821
  %850 = vadd.xlane.f32.xlu0 %v849
  %v851 = vpop.xlane.xlu0 %850
  %v852 = vadd.f32 %v822, %v823
  %853 = vadd.xlane.f32.xlu0 %v852
  %v854 = vpop.xlane.xlu0 %853
  %v855 = vsel %vm424, %v824, 0.0
  %v856 = vsel %vm424, %v825, 0.0
  %v857 = vadd.f32 %v855, %v856
  %858 = vadd.xlane.f32.xlu0 %v857
  %v859 = vpop.xlane.xlu0 %858
  %v860 = vadd.f32 %v826, %v827
  %861 = vadd.xlane.f32.xlu0 %v860
  %v862 = vpop.xlane.xlu0 %861
  %v863 = vadd.f32 %v828, %v829
  %864 = vadd.xlane.f32.xlu0 %v863
  %v865 = vpop.xlane.xlu0 %864
  %v866 = vsel %vm424, %v830, 0.0
  %v867 = vsel %vm424, %v831, 0.0
  %v868 = vadd.f32 %v866, %v867
  %869 = vadd.xlane.f32.xlu0 %v868
  %v870 = vpop.xlane.xlu0 %869
  %v871 = vadd.f32 %v832, %v833
  %872 = vadd.xlane.f32.xlu0 %v871
  %v873 = vpop.xlane.xlu0 %872
  %v874 = vadd.f32 %v834, %v835
  %875 = vadd.xlane.f32.xlu0 %v874
  %v876 = vpop.xlane.xlu0 %875
  %v877 = vsel %vm424, %v836, 0.0
  %v878 = vsel %vm424, %v837, 0.0
  %v879 = vadd.f32 %v877, %v878
  %880 = vadd.xlane.f32.xlu0 %v879
  %v881 = vpop.xlane.xlu0 %880
  %v882 = vrcp.pop %v680
  %v883 = vrcp.pop %v683
  %v884 = vrcp.pop %v688
  %v885 = vrcp.pop %v691
  %v886 = vrcp.pop %v694
  %v887 = vrcp.pop %v699
  %v888 = vrcp.pop %v702
  %v889 = vrcp.pop %v705
  %v890 = vrcp.pop %v710
  %v891 = vrcp.pop %v713
  %v892 = vrcp.pop %v716
  %v893 = vrcp.pop %v721
  %v894 = vmul.f32 %v760, %v882
  %v895 = vmul.f32 %v763, %v883
  %v896 = vmul.f32 %v768, %v884
  %v897 = vmul.f32 %v771, %v885
  %v898 = vmul.f32 %v774, %v886
  %v899 = vmul.f32 %v779, %v887
  %v900 = vmul.f32 %v782, %v888
  %v901 = vmul.f32 %v785, %v889
  %v902 = vmul.f32 %v790, %v890
  %v903 = vmul.f32 %v793, %v891
  %v904 = vmul.f32 %v796, %v892
  %v905 = vmul.f32 %v801, %v893
  %v906 = vmul.f32 %v840, %v882
  %v907 = vmul.f32 %v843, %v883
  %v908 = vmul.f32 %v848, %v884
  %v909 = vmul.f32 %v851, %v885
  %v910 = vmul.f32 %v854, %v886
  %v911 = vmul.f32 %v859, %v887
  %v912 = vmul.f32 %v862, %v888
  %v913 = vmul.f32 %v865, %v889
  %v914 = vmul.f32 %v870, %v890
  %v915 = vmul.f32 %v873, %v891
  %v916 = vmul.f32 %v876, %v892
  %v917 = vmul.f32 %v881, %v893
  %v918 = vlaneseq
  %v919 = vand.u32 %v918, 127
  %vm920 = vcmp.eq.s32.totalorder %v919, 0
  %vm921 = vcmp.eq.s32.totalorder %v919, 1
  %923 = vset.pattern.permute.xlu0 0
  %924 = vperm.xlu0 %923, %v539
  %v925 = vpop.permute.xlu0 %924
  %928 = vset.pattern.permute.xlu0 0
  %929 = vperm.xlu0 %928, %v541
  %v930 = vpop.permute.xlu0 %929
  %933 = vset.pattern.permute.xlu0 0
  %934 = vperm.xlu0 %933, %v543
  %v935 = vpop.permute.xlu0 %934
  %938 = vset.pattern.permute.xlu0 0
  %939 = vperm.xlu0 %938, %v545
  %v940 = vpop.permute.xlu0 %939
  %943 = vset.pattern.permute.xlu0 0
  %944 = vperm.xlu0 %943, %v547
  %v945 = vpop.permute.xlu0 %944
  %948 = vset.pattern.permute.xlu0 0
  %949 = vperm.xlu0 %948, %v549
  %v950 = vpop.permute.xlu0 %949
  %953 = vset.pattern.permute.xlu0 0
  %954 = vperm.xlu0 %953, %v551
  %v955 = vpop.permute.xlu0 %954
  %958 = vset.pattern.permute.xlu0 0
  %959 = vperm.xlu0 %958, %v553
  %v960 = vpop.permute.xlu0 %959
  %963 = vset.pattern.permute.xlu0 0
  %964 = vperm.xlu0 %963, %v555
  %v965 = vpop.permute.xlu0 %964
  %968 = vset.pattern.permute.xlu0 0
  %969 = vperm.xlu0 %968, %v557
  %v970 = vpop.permute.xlu0 %969
  %973 = vset.pattern.permute.xlu0 0
  %974 = vperm.xlu0 %973, %v559
  %v975 = vpop.permute.xlu0 %974
  %978 = vset.pattern.permute.xlu0 0
  %979 = vperm.xlu0 %978, %v561
  %v980 = vpop.permute.xlu0 %979
  %v982 = vsel %vm921, %v906, %v925
  %v983 = vsel %vm921, %v907, %v930
  %v984 = vsel %vm921, %v908, %v935
  %v985 = vsel %vm921, %v909, %v940
  %v986 = vsel %vm921, %v910, %v945
  %v987 = vsel %vm921, %v911, %v950
  %v988 = vsel %vm921, %v912, %v955
  %v989 = vsel %vm921, %v913, %v960
  %v990 = vsel %vm921, %v914, %v965
  %v991 = vsel %vm921, %v915, %v970
  %v992 = vsel %vm921, %v916, %v975
  %v993 = vsel %vm921, %v917, %v980
  %v994 = vsel %vm920, %v894, %v982
  %v995 = vsel %vm920, %v895, %v983
  %v996 = vsel %vm920, %v896, %v984
  %v997 = vsel %vm920, %v897, %v985
  %v998 = vsel %vm920, %v898, %v986
  %v999 = vsel %vm920, %v899, %v987
  %v1000 = vsel %vm920, %v900, %v988
  %v1001 = vsel %vm920, %v901, %v989
  %v1002 = vsel %vm920, %v902, %v990
  %v1003 = vsel %vm920, %v903, %v991
  %v1004 = vsel %vm920, %v904, %v992
  %v1005 = vsel %vm920, %v905, %v993
  %vm1006 = vcmask 23552
  %1007 = vst.msk [vmem:[%s5] sm:$0xff] %vm1006, %v994
  %1008 = vst.msk [vmem:[%s5 + $0x8] sm:$0xff] %vm1006, %v995
  %vm1009 = vcmask 16384
  %1010 = vst.msk [vmem:[%s5 + $0x10] sm:$0x1] %vm1009, %v996
  %1011 = vst.msk [vmem:[%s5 + $0x18] sm:$0xff] %vm1006, %v997
  %1012 = vst.msk [vmem:[%s5 + $0x20] sm:$0xff] %vm1006, %v998
  %1013 = vst.msk [vmem:[%s5 + $0x28] sm:$0x1] %vm1009, %v999
  %1014 = vst.msk [vmem:[%s5 + $0x30] sm:$0xff] %vm1006, %v1000
  %1015 = vst.msk [vmem:[%s5 + $0x38] sm:$0xff] %vm1006, %v1001
  %1016 = vst.msk [vmem:[%s5 + $0x40] sm:$0x1] %vm1009, %v1002
  %1017 = vst.msk [vmem:[%s5 + $0x48] sm:$0xff] %vm1006, %v1003
  %1018 = vst.msk [vmem:[%s5 + $0x50] sm:$0xff] %vm1006, %v1004
  %1019 = vst.msk [vmem:[%s5 + $0x58] sm:$0x1] %vm1009, %v1005
  // Predicated region
  $region22: #{alg_pose3d_pre_triangulation.1} parent=0 // pred_check
    _
  $region23: #{alg_pose3d_pre_triangulation.1} parent=0 // pred_check_branch
    %1021 = sbr.rel (0) target = $region25
  $region24: #{alg_pose3d_pre_triangulation.1} parent=0 // pred_region
    _
  $region25: #{alg_pose3d_pre_triangulation.1} parent=0 // pred_fallthru
    _
  // Predicated region
  $region26: #{alg_pose3d_pre_triangulation.1} parent=0 // pred_check
    _
  $region27: #{alg_pose3d_pre_triangulation.1} parent=0 // pred_check_branch
    %1023 = sbr.rel (0) target = $region29
  $region28: #{alg_pose3d_pre_triangulation.1} parent=0 // pred_region
    _
  $region29: #{alg_pose3d_pre_triangulation.1} parent=0 // pred_fallthru
    _

</llo_original>
